<compile_context>
chip_gen: v7x
topology: tpu7x:2x2x1
jax: 0.10.0
libtpu: 0.0.40
codegen_flags: <defaults>
</compile_context>

<pallas_src>
import math

import jax
import jax.numpy as jnp
from jax import lax
from jax.experimental import pallas as pl
from jax.experimental.pallas import tpu as pltpu

# ----------------------------- config ---------------------------------------
D_MODEL = 32
HEAD_DIM = 8
BATCH = 2
SEQ = 8
DROPOUT_P = 0.1          # nn.Dropout is identity in eval / inference mode


# --------------------------- Pallas kernel ----------------------------------
def _attention_head_kernel(x_ref, w_ref, brow_ref, mbias_ref, o_ref):
    """One batch element per grid step.

    x_ref    : (3T, 3D) bf16  block-diagonal [query | key | value]
    w_ref    : (3D, Hd) bf16  row-stacked   [wq*scale ; wk ; wv]
    brow_ref : (3T, Hd) f32   row-stacked broadcast biases [bq*scale ; bk ; bv]
    mbias_ref: (T, T)   f32   additive mask bias (0 or -1e30)
    o_ref    : (T, Hd)  f32   attention output for this batch element
    """
    T, Hd = o_ref.shape

    # Single fused QKV projection on the MXU (f32 accumulation).
    proj = jnp.dot(x_ref[...], w_ref[...],
                   preferred_element_type=jnp.float32) + brow_ref[...]

    # Recover q/k/v with sublane-aligned row slices (T is a multiple of 8).
    q = proj[0:T, :]          # already carries the 1/sqrt(Hd) scale
    k = proj[T:2 * T, :]
    v = proj[2 * T:3 * T, :]

    # scores = q @ k^T + mask bias (contract last dims of both operands:
    # no materialized transpose of k).
    s = lax.dot_general(q.astype(jnp.bfloat16), k.astype(jnp.bfloat16),
                        (((1,), (1,)), ((), ())),
                        preferred_element_type=jnp.float32)
    s = s + mbias_ref[...]

    # Numerically-stable softmax (f32 elementwise; reciprocal on the EUP slot).
    s = s - jnp.max(s, axis=-1, keepdims=True)
    e = jnp.exp(s)
    p = e * pl.reciprocal(jnp.sum(e, axis=-1, keepdims=True), approx=True)

    # Attention output.  Dropout is identity at inference.
    # TODO(synk): training-mode dropout would use pltpu.prng_seed / prng_random_bits.
    o_ref[...] = jnp.dot(p.astype(jnp.bfloat16), v.astype(jnp.bfloat16),
                         preferred_element_type=jnp.float32)


# ------------------------------ wrapper --------------------------------------
def attention_head(query, key, value, params, mask=None):
    """Pallas forward of AttentionHead.forward(query, key, value, mask)."""
    B, T, D = query.shape
    Hd = params["wq"].shape[1]
    inv_scale = 1.0 / math.sqrt(Hd)

    # Fold the softmax 1/sqrt(Hd) scale into the q projection (wrapper-side, free).
    wq = params["wq"] * inv_scale
    bq = params["bq"] * inv_scale

    # Fused block-diagonal QKV operand so the kernel does ONE matmul:
    #   x_bd (3T, 3D) @ w_f (3D, Hd) -> rows [0:T]=q, [T:2T]=k, [2T:3T]=v.
    z = jnp.zeros((B, T, D), query.dtype)
    x_bd = jnp.concatenate([
        jnp.concatenate([query, z, z], axis=-1),
        jnp.concatenate([z, key, z], axis=-1),
        jnp.concatenate([z, z, value], axis=-1),
    ], axis=1).astype(jnp.bfloat16)                                # (B, 3T, 3D)
    w_f = jnp.concatenate([wq, params["wk"], params["wv"]],
                          axis=0).astype(jnp.bfloat16)             # (3D, Hd)
    b_rows = jnp.concatenate([
        jnp.broadcast_to(bq, (T, Hd)),
        jnp.broadcast_to(params["bk"], (T, Hd)),
        jnp.broadcast_to(params["bv"], (T, Hd)),
    ], axis=0).astype(jnp.float32)                                 # (3T, Hd)

    # Boolean mask -> additive bias once (0 / -1e30): no per-call compare+select
    # inside the kernel and no -inf -> NaN hazard.  NOTE: a fully-masked row
    # yields a uniform 1/T attention row instead of the reference's NaNs
    # (benign for causal masks).
    if mask is None:
        mbias = jnp.zeros((T, T), jnp.float32)
    else:
        mbias = jnp.where(mask == 0, jnp.float32(-1e30), jnp.float32(0.0))

    return pl.pallas_call(
        _attention_head_kernel,
        out_shape=jax.ShapeDtypeStruct((B, T, Hd), jnp.float32),
        grid_spec=pltpu.PrefetchScalarGridSpec(
            num_scalar_prefetch=0,
            grid=(B,),
            in_specs=[
                pl.BlockSpec((None, 3 * T, 3 * D), lambda b: (b, 0, 0)),
                pl.BlockSpec((3 * D, Hd), lambda b: (0, 0)),
                pl.BlockSpec((3 * T, Hd), lambda b: (0, 0)),
                pl.BlockSpec((T, T), lambda b: (0, 0)),
            ],
            out_specs=pl.BlockSpec((None, T, Hd), lambda b: (b, 0, 0)),
        ),
        compiler_params=pltpu.CompilerParams(
            dimension_semantics=("parallel",)),
    )(x_bd, w_f, b_rows, mbias)


# --------------------------- parameter init ----------------------------------
def _linear(key, fan_in, fan_out):
    kw, kb = jax.random.split(key)
    bound = 1.0 / math.sqrt(fan_in)
    w = jax.random.uniform(kw, (fan_in, fan_out), jnp.float32, -bound, bound)
    b = jax.random.uniform(kb, (1, fan_out), jnp.float32, -bound, bound)
    return w, b


def init_params(key, d_model, head_dim):
    kq, kk, kv = jax.random.split(key, 3)
    wq, bq = _linear(kq, d_model, head_dim)
    wk, bk = _linear(kk, d_model, head_dim)
    wv, bv = _linear(kv, d_model, head_dim)
    return dict(wq=wq, bq=bq, wk=wk, bk=bk, wv=wv, bv=bv)


# ------------------------- pure-JAX reference --------------------------------
def attention_head_ref(query, key, value, params, mask=None):
    q = query @ params["wq"] + params["bq"]
    k = key @ params["wk"] + params["bk"]
    v = value @ params["wv"] + params["bv"]
    w = jnp.einsum("btd,bsd->bts", q, k)
    if mask is not None:
        w = jnp.where(mask == 0, -jnp.inf, w)
    w = jax.nn.softmax(w / math.sqrt(params["wq"].shape[1]), axis=-1)
    return jnp.einsum("bts,bsd->btd", w, v)


# -------------------------------- main ----------------------------------------
if __name__ == "__main__":
    root = jax.random.PRNGKey(0)
    kq, kk, kv, kp = jax.random.split(root, 4)

    query = jax.random.normal(kq, (BATCH, SEQ, D_MODEL), jnp.float32)
    key_in = jax.random.normal(kk, (BATCH, SEQ, D_MODEL), jnp.float32)
    value = jax.random.normal(kv, (BATCH, SEQ, D_MODEL), jnp.float32)
    params = init_params(kp, D_MODEL, HEAD_DIM)

    # causal mask (lower-triangular), as typically passed to a GPT attention head
    causal = jnp.tril(jnp.ones((SEQ, SEQ), jnp.float32))

    out = attention_head(query, key_in, value, params, mask=causal)
    out = jax.block_until_ready(out)

    assert out.shape == (BATCH, SEQ, HEAD_DIM)
    assert bool(jnp.all(jnp.isfinite(out)))

    ref = attention_head_ref(query, key_in, value, params, mask=causal)
    max_err = float(jnp.max(jnp.abs(out - ref)))
    # bf16 MXU operands + approx EUP reciprocal -> tolerance sized for bf16 compute.
    assert max_err < 5e-2, f"max |err| vs reference = {max_err}"

    print("KERNEL_OK")
</pallas_src>

<mosaic_0001>
module attributes {stable_mosaic.version = 11 : i64} {
  func.func @_attention_head_kernel(%arg0: i32, %arg1: memref<1x24x96xbf16, #tpu.memory_space<vmem>>, %arg2: memref<96x8xbf16, #tpu.memory_space<vmem>>, %arg3: memref<24x8xf32, #tpu.memory_space<vmem>>, %arg4: memref<8x8xf32, #tpu.memory_space<vmem>>, %arg5: memref<1x8x8xf32, #tpu.memory_space<vmem>>) attributes {dimension_semantics = [#tpu.dimension_semantics<parallel>], iteration_bounds = array<i64: 2>, scalar_prefetch = 0 : i64, scratch_operands = 0 : i64, tpu.core_type = #tpu.core_type<tc>, window_params = [{transform_indices = @transform_0, window_bounds = array<i64: 1, 24, 96>}, {pipeline_mode = #tpu.pipeline_mode<synchronous>, transform_indices = @transform_1, window_bounds = array<i64: 96, 8>}, {pipeline_mode = #tpu.pipeline_mode<synchronous>, transform_indices = @transform_2, window_bounds = array<i64: 24, 8>}, {pipeline_mode = #tpu.pipeline_mode<synchronous>, transform_indices = @transform_3, window_bounds = array<i64: 8, 8>}, {transform_indices = @transform_4, window_bounds = array<i64: 1, 8, 8>}]} {
    %c0 = arith.constant 0 : index
    %c0_0 = arith.constant 0 : index
    %c0_1 = arith.constant 0 : index
    %0 = vector.load %arg1[%c0, %c0_0, %c0_1] : memref<1x24x96xbf16, #tpu.memory_space<vmem>>, vector<1x24x96xbf16>
    %1 = vector.shape_cast %0 : vector<1x24x96xbf16> to vector<24x96xbf16>
    %c0_2 = arith.constant 0 : index
    %c0_3 = arith.constant 0 : index
    %2 = vector.load %arg2[%c0_2, %c0_3] : memref<96x8xbf16, #tpu.memory_space<vmem>>, vector<96x8xbf16>
    %cst = arith.constant dense<0.000000e+00> : vector<24x8xf32>
    %3 = tpu.matmul %1, %2, %cst {dimension_numbers = #tpu.dot_dimension_numbers<[1], [0], [0], [1], [0, 0, 1, 1], [], []>} : vector<24x96xbf16>, vector<96x8xbf16>, vector<24x8xf32> -> vector<24x8xf32>
    %c0_4 = arith.constant 0 : index
    %c0_5 = arith.constant 0 : index
    %4 = vector.load %arg3[%c0_4, %c0_5] : memref<24x8xf32, #tpu.memory_space<vmem>>, vector<24x8xf32>
    %5 = arith.addf %3, %4 : vector<24x8xf32>
    %6 = vector.extract_strided_slice %5 {offsets = [0, 0], sizes = [8, 8], strides = [1, 1]} : vector<24x8xf32> to vector<8x8xf32>
    %7 = vector.extract_strided_slice %5 {offsets = [8, 0], sizes = [8, 8], strides = [1, 1]} : vector<24x8xf32> to vector<8x8xf32>
    %8 = vector.extract_strided_slice %5 {offsets = [16, 0], sizes = [8, 8], strides = [1, 1]} : vector<24x8xf32> to vector<8x8xf32>
    %9 = arith.truncf %6 : vector<8x8xf32> to vector<8x8xbf16>
    %10 = arith.truncf %7 : vector<8x8xf32> to vector<8x8xbf16>
    %cst_6 = arith.constant dense<0.000000e+00> : vector<8x8xf32>
    %11 = tpu.matmul %9, %10, %cst_6 {dimension_numbers = #tpu.dot_dimension_numbers<[1], [1], [0], [0], [0, 0, 1, 0], [], []>} : vector<8x8xbf16>, vector<8x8xbf16>, vector<8x8xf32> -> vector<8x8xf32>
    %c0_7 = arith.constant 0 : index
    %c0_8 = arith.constant 0 : index
    %12 = vector.load %arg4[%c0_7, %c0_8] : memref<8x8xf32, #tpu.memory_space<vmem>>, vector<8x8xf32>
    %13 = arith.addf %11, %12 : vector<8x8xf32>
    %cst_9 = arith.constant dense<0xFF800000> : vector<8xf32>
    %14 = vector.multi_reduction <maximumf>, %13, %cst_9 [1] : vector<8x8xf32> to vector<8xf32>
    %15 = vector.shape_cast %14 : vector<8xf32> to vector<8x1xf32>
    %16 = vector.broadcast %15 : vector<8x1xf32> to vector<8x8xf32>
    %17 = arith.subf %13, %16 : vector<8x8xf32>
    %18 = math.exp %17 : vector<8x8xf32>
    %cst_10 = arith.constant dense<0.000000e+00> : vector<8xf32>
    %19 = vector.multi_reduction <add>, %18, %cst_10 [1] : vector<8x8xf32> to vector<8xf32>
    %20 = vector.shape_cast %19 : vector<8xf32> to vector<8x1xf32>
    %21 = tpu.reciprocal %20 {approx = true} : vector<8x1xf32> -> vector<8x1xf32>
    %22 = vector.broadcast %21 : vector<8x1xf32> to vector<8x8xf32>
    %23 = arith.mulf %18, %22 : vector<8x8xf32>
    %24 = arith.truncf %23 : vector<8x8xf32> to vector<8x8xbf16>
    %25 = arith.truncf %8 : vector<8x8xf32> to vector<8x8xbf16>
    %cst_11 = arith.constant dense<0.000000e+00> : vector<8x8xf32>
    %26 = tpu.matmul %24, %25, %cst_11 {dimension_numbers = #tpu.dot_dimension_numbers<[1], [0], [0], [1], [0, 0, 1, 1], [], []>} : vector<8x8xbf16>, vector<8x8xbf16>, vector<8x8xf32> -> vector<8x8xf32>
    %c0_12 = arith.constant 0 : index
    %c0_13 = arith.constant 0 : index
    %c0_14 = arith.constant 0 : index
    %27 = vector.load %arg5[%c0_12, %c0_13, %c0_14] : memref<1x8x8xf32, #tpu.memory_space<vmem>>, vector<1x8x8xf32>
    %28 = vector.shape_cast %27 : vector<1x8x8xf32> to vector<8x8xf32>
    %29 = vector.shape_cast %26 : vector<8x8xf32> to vector<1x8x8xf32>
    tpu.vector_store %arg5[%c0_12, %c0_13, %c0_14], %29 {strides = array<i32>} : memref<1x8x8xf32, #tpu.memory_space<vmem>>, vector<1x8x8xf32>,
    return
  }
  func.func @transform_0(%arg0: i32) -> (i32, i32, i32) {
    %c0_i32 = arith.constant 0 : i32
    %c0_i32_0 = arith.constant 0 : i32
    %c0_i32_1 = arith.constant 0 : i32
    return %arg0, %c0_i32, %c0_i32_0 : i32, i32, i32
  }
  func.func @transform_1(%arg0: i32) -> (i32, i32) {
    %c0_i32 = arith.constant 0 : i32
    %c0_i32_0 = arith.constant 0 : i32
    %c0_i32_1 = arith.constant 0 : i32
    return %c0_i32, %c0_i32_0 : i32, i32
  }
  func.func @transform_2(%arg0: i32) -> (i32, i32) {
    %c0_i32 = arith.constant 0 : i32
    %c0_i32_0 = arith.constant 0 : i32
    %c0_i32_1 = arith.constant 0 : i32
    return %c0_i32, %c0_i32_0 : i32, i32
  }
  func.func @transform_3(%arg0: i32) -> (i32, i32) {
    %c0_i32 = arith.constant 0 : i32
    %c0_i32_0 = arith.constant 0 : i32
    %c0_i32_1 = arith.constant 0 : i32
    return %c0_i32, %c0_i32_0 : i32, i32
  }
  func.func @transform_4(%arg0: i32) -> (i32, i32, i32) {
    %c0_i32 = arith.constant 0 : i32
    %c0_i32_0 = arith.constant 0 : i32
    %c0_i32_1 = arith.constant 0 : i32
    return %arg0, %c0_i32, %c0_i32_0 : i32, i32, i32
  }
}

</mosaic_0001>

<llo_original>
// kernel: tpu_custom_call.1
$region0: #{tpu_custom_call.1}
  #allocation0 [shape = 'u32[]', space=smem, size = 0x4, offset = 0x4, fixed_abs, tag = 'smem constant byte address 0x4 - core index']
  #allocation1 [shape = 'u32[144,128]{1,0:T(1,128)}', space=vmem, size = 0x12000, scoped, tag = 'internal scratch']
  %s0 = inlined_call_operand.vmem [shape: bf16[2,24,96], index: 0, kind: input, shape index: {}]
  %s1 = inlined_call_operand.vmem [shape: bf16[96,8], index: 1, kind: input, shape index: {}]
  %s2 = inlined_call_operand.vmem [shape: f32[24,8], index: 2, kind: input, shape index: {}]
  %s3 = inlined_call_operand.vmem [shape: f32[8,8], index: 3, kind: input, shape index: {}]
  %s4 = inlined_call_operand.hbm [shape: f32[2,8,8], index: 4, kind: output, shape index: {}]
  %s5 = sld [smem:[#allocation0]]
  $region49: #{tpu_custom_call.1} parent=0
    _
  %s7 = ssub.s32 1, %s5
  %s8 = scalar_select 0, %s7, %s5
  $region1: #{tpu_custom_call.1} parent=0
    #allocation2 [shape = 'u8[8192]{0}', space=vmem, size = 0x2000, scoped, tag = 'output window, operand 0']
    #allocation3 [shape = 's32[2]{0}', space=sflag, size = 0x8, scoped, tag = 'scoped memory for tpu_custom_call.1']
    %9 = vsyncpa [#allocation3], 0
    %s10 = scalar_lea.sflag [#allocation3], 1
    %11 = vsyncpa %s10, 0
    loop: start=0, step=1, limit=4
    $region2: #{tpu_custom_call.1} parent=1 // loop_pre_header
      _
    $region3: #{tpu_custom_call.1} parent=1 // loop_header
      %s13 = sphi 0, %s17
      %p14 = scmp.ge.s32.totalorder %s13, 4
      %s23 = sphi 0, %s25
      %s26 = sphi 0, %s23
      %s27 = sphi 0, %s26
      %s43 = sphi 0, %s27
      %s47 = sphi 0, %s47
      %s49 = sphi 0, %s47
      %s50 = sphi 0, %s49
      %s64 = sphi 0, %s50
      %s68 = sphi 0, %s68
      %s70 = sphi 0, %s68
      %s71 = sphi 0, %s70
      %s85 = sphi 0, %s71
      %s89 = sphi 0, %s89
      %s91 = sphi 0, %s89
      %s92 = sphi 0, %s91
      %s106 = sphi 0, %s92
      %s112 = sphi 0, %s114
      %s115 = sphi 0, %s112
      %s116 = sphi 0, %s115
      %s132 = sphi 0, %s116
    $region4: #{tpu_custom_call.1} parent=1 // loop_header_branch
      %16 = sbr.rel (%p14) target = $region8
    $region5: #{tpu_custom_call.1} parent=1 // loop_body
      %s18 = ssub.s32 %s13, 1
      %s19 = ssub.s32 %s13, 2
      %s20 = sadd.s32 %s13, 1
      %s21 = ssub.s32 %s13, %s20
      %p22 = scmp.eq.s32.totalorder %s21, 0
      %s24 = sadd.s32 %s23, 1
      %s25 = scalar_select %p22, %s23, %s24
      %p28 = pneg %p22
      %p29 = scmp.eq.s32.totalorder %s13, 1
      %p30 = por %p28, %p29
      %p31 = scmp.ne.s32.totalorder %s23, %s26
      %p32 = scmp.eq.s32.totalorder %s13, 0
      %p33 = por %p31, %p32
      %p34 = scmp.ne.s32.totalorder %s23, %s26
      %p35 = scmp.eq.s32.totalorder %s18, 1
      %p36 = por %p34, %p35
      %p37 = scmp.ne.s32.totalorder %s26, %s27
      %p38 = scmp.eq.s32.totalorder %s18, 0
      %p39 = por %p37, %p38
      %p40 = scmp.ne.s32.totalorder %s26, %s27
      %p41 = scmp.eq.s32.totalorder %s19, 1
      %p42 = por %p40, %p41
      %p44 = scmp.ne.s32.totalorder %s27, %s43
      %p45 = scmp.eq.s32.totalorder %s19, 0
      %p46 = por %p44, %p45
      %s48 = sadd.s32 %s47, 1
      %p51 = scmp.eq.s32.totalorder %s13, 1
      %p52 = scmp.ne.s32.totalorder %s47, %s49
      %p53 = scmp.eq.s32.totalorder %s13, 0
      %p54 = por %p52, %p53
      %p55 = scmp.ne.s32.totalorder %s47, %s49
      %p56 = scmp.eq.s32.totalorder %s18, 1
      %p57 = por %p55, %p56
      %p58 = scmp.ne.s32.totalorder %s49, %s50
      %p59 = scmp.eq.s32.totalorder %s18, 0
      %p60 = por %p58, %p59
      %p61 = scmp.ne.s32.totalorder %s49, %s50
      %p62 = scmp.eq.s32.totalorder %s19, 1
      %p63 = por %p61, %p62
      %p65 = scmp.ne.s32.totalorder %s50, %s64
      %p66 = scmp.eq.s32.totalorder %s19, 0
      %p67 = por %p65, %p66
      %s69 = sadd.s32 %s68, 1
      %p72 = scmp.eq.s32.totalorder %s13, 1
      %p73 = scmp.ne.s32.totalorder %s68, %s70
      %p74 = scmp.eq.s32.totalorder %s13, 0
      %p75 = por %p73, %p74
      %p76 = scmp.ne.s32.totalorder %s68, %s70
      %p77 = scmp.eq.s32.totalorder %s18, 1
      %p78 = por %p76, %p77
      %p79 = scmp.ne.s32.totalorder %s70, %s71
      %p80 = scmp.eq.s32.totalorder %s18, 0
      %p81 = por %p79, %p80
      %p82 = scmp.ne.s32.totalorder %s70, %s71
      %p83 = scmp.eq.s32.totalorder %s19, 1
      %p84 = por %p82, %p83
      %p86 = scmp.ne.s32.totalorder %s71, %s85
      %p87 = scmp.eq.s32.totalorder %s19, 0
      %p88 = por %p86, %p87
      %s90 = sadd.s32 %s89, 1
      %p93 = scmp.eq.s32.totalorder %s13, 1
      %p94 = scmp.ne.s32.totalorder %s89, %s91
      %p95 = scmp.eq.s32.totalorder %s13, 0
      %p96 = por %p94, %p95
      %p97 = scmp.ne.s32.totalorder %s89, %s91
      %p98 = scmp.eq.s32.totalorder %s18, 1
      %p99 = por %p97, %p98
      %p100 = scmp.ne.s32.totalorder %s91, %s92
      %p101 = scmp.eq.s32.totalorder %s18, 0
      %p102 = por %p100, %p101
      %p103 = scmp.ne.s32.totalorder %s91, %s92
      %p104 = scmp.eq.s32.totalorder %s19, 1
      %p105 = por %p103, %p104
      %p107 = scmp.ne.s32.totalorder %s92, %s106
      %p108 = scmp.eq.s32.totalorder %s19, 0
      %p109 = por %p107, %p108
      %s110 = ssub.s32 %s13, %s20
      %p111 = scmp.eq.s32.totalorder %s110, 0
      %s113 = sadd.s32 %s112, 1
      %s114 = scalar_select %p111, %s112, %s113
      %p117 = pneg %p111
      %p118 = scmp.eq.s32.totalorder %s13, 1
      %p119 = por %p117, %p118
      %p120 = scmp.ne.s32.totalorder %s112, %s115
      %p121 = scmp.eq.s32.totalorder %s13, 0
      %p122 = por %p120, %p121
      %p123 = scmp.ne.s32.totalorder %s112, %s115
      %p124 = scmp.eq.s32.totalorder %s18, 1
      %p125 = por %p123, %p124
      %p126 = scmp.ne.s32.totalorder %s115, %s116
      %p127 = scmp.eq.s32.totalorder %s18, 0
      %p128 = por %p126, %p127
      %p129 = scmp.ne.s32.totalorder %s115, %s116
      %p130 = scmp.eq.s32.totalorder %s19, 1
      %p131 = por %p129, %p130
      %p133 = scmp.ne.s32.totalorder %s116, %s132
      %p134 = scmp.eq.s32.totalorder %s19, 0
      %p135 = por %p133, %p134
      %p136 = scmp.le.s32.totalorder 1, %s13
      %p137 = scmp.lt.s32.totalorder %s13, 3
      %p138 = pnand %p136, %p137
      %p139 = pneg %p138
      // Predicated region
      $region9: #{tpu_custom_call.1} parent=5 // pred_check
        _
      $region10: #{tpu_custom_call.1} parent=5 // pred_check_branch
        %141 = sbr.rel (%p138) target = $region12
      $region11: #{tpu_custom_call.1} parent=5 // pred_region
        %s142 = ssub.s32 %s13, 1
        // Predicated region
        $region13: #{tpu_custom_call.1} parent=11 // pred_check
          %p143 = pneg %p60
        $region14: #{tpu_custom_call.1} parent=11 // pred_check_branch
          %145 = sbr.rel (%p143) target = $region16
        $region15: #{tpu_custom_call.1} parent=11 // pred_region
          _
        $region16: #{tpu_custom_call.1} parent=11 // pred_fallthru
          _
        // Predicated region
        $region17: #{tpu_custom_call.1} parent=11 // pred_check
          %p146 = pneg %p81
        $region18: #{tpu_custom_call.1} parent=11 // pred_check_branch
          %148 = sbr.rel (%p146) target = $region20
        $region19: #{tpu_custom_call.1} parent=11 // pred_region
          _
        $region20: #{tpu_custom_call.1} parent=11 // pred_fallthru
          _
        // Predicated region
        $region21: #{tpu_custom_call.1} parent=11 // pred_check
          %p149 = pneg %p102
        $region22: #{tpu_custom_call.1} parent=11 // pred_check_branch
          %151 = sbr.rel (%p149) target = $region24
        $region23: #{tpu_custom_call.1} parent=11 // pred_region
          _
        $region24: #{tpu_custom_call.1} parent=11 // pred_fallthru
          _
      $region12: #{tpu_custom_call.1} parent=5 // pred_fallthru
        _
      %p152 = scmp.lt.s32.totalorder %s13, 2
      // Predicated region
      $region25: #{tpu_custom_call.1} parent=5 // pred_check
        %p153 = pneg %p152
      $region26: #{tpu_custom_call.1} parent=5 // pred_check_branch
        %155 = sbr.rel (%p153) target = $region28
      $region27: #{tpu_custom_call.1} parent=5 // pred_region
        // Predicated region
        $region29: #{tpu_custom_call.1} parent=27 // pred_check
          %p156 = pneg %p33
        $region30: #{tpu_custom_call.1} parent=27 // pred_check_branch
          %158 = sbr.rel (%p156) target = $region32
        $region31: #{tpu_custom_call.1} parent=27 // pred_region
          %p159 = scmp.lt.s32.totalorder %s13, 1
          %s160 = scalar_select %p159, %s13, 1
          %s161 = smul.addr %s160, 3
          %s162 = smul.addr %s161, 4
          %s163 = scalar_lea.vmem %s0, %s162
        $region32: #{tpu_custom_call.1} parent=27 // pred_fallthru
          _
      $region28: #{tpu_custom_call.1} parent=5 // pred_fallthru
        _
      %p164 = scmp.le.s32.totalorder 1, %s13
      %p165 = scmp.lt.s32.totalorder %s13, 3
      %p166 = pnand %p164, %p165
      %p167 = pneg %p166
      // Predicated region
      $region33: #{tpu_custom_call.1} parent=5 // pred_check
        _
      $region34: #{tpu_custom_call.1} parent=5 // pred_check_branch
        %169 = sbr.rel (%p166) target = $region36
      $region35: #{tpu_custom_call.1} parent=5 // pred_region
        %s170 = ssub.s32 %s13, 1
        %p171 = scmp.lt.s32.totalorder %s18, 1
        %s172 = scalar_select %p171, %s18, 1
        %s173 = smul.addr %s172, 3
        %s174 = smul.addr %s173, 4
        %s175 = scalar_lea.vmem %s0, %s174
        %p176 = pneg %p39
        %p177 = pneg %p36
        %p178 = pneg %p60
        %p179 = pneg %p57
        %p180 = pneg %p81
        %p181 = pneg %p78
        %p182 = pneg %p102
        %p183 = pneg %p99
        %p184 = pneg %p128
        %p185 = pneg %p125
        %s186 = sand.u32 %s115, 1
        %s187 = scalar_lea.sflag [#allocation3], %s186
        %s188 = sand.u32 %s115, 1
        %s189 = smul.addr %s188, 8
        %s190 = scalar_lea.vmem [#allocation2], %s189
        %p191 = scmp.lt.s32.totalorder %s18, 1
        %s192 = scalar_select %p191, %s18, 1
        %s193 = smul.addr %s192, 3
        %s194 = smul.addr %s193, 4
        %s195 = scalar_lea.vmem %s0, %s194
        %v197 = vld [vmem:[%s195] sm:$0xf]
        %v198 = vld [vmem:[%s195 + $0x4] sm:$0xf]
        %v199 = vld [vmem:[%s195 + $0x8] sm:$0xf]
        %v200 = vld [vmem:[%s1] sm:$0xf]
        %v201 = vld [vmem:[%s1 + $0x4] sm:$0xf]
        %v202 = vld [vmem:[%s1 + $0x8] sm:$0xf]
        %v203 = vld [vmem:[%s1 + $0xc] sm:$0xf]
        %v204 = vld [vmem:[%s1 + $0x10] sm:$0xf]
        %v205 = vld [vmem:[%s1 + $0x14] sm:$0xf]
        %v206 = vld [vmem:[%s1 + $0x18] sm:$0xf]
        %v207 = vld [vmem:[%s1 + $0x1c] sm:$0xf]
        %v208 = vld [vmem:[%s1 + $0x20] sm:$0xf]
        %v209 = vld [vmem:[%s1 + $0x24] sm:$0xf]
        %v210 = vld [vmem:[%s1 + $0x28] sm:$0xf]
        %v211 = vld [vmem:[%s1 + $0x2c] sm:$0xf]
        %v212 = vld [vmem:[%s2] sm:$0xff]
        %v213 = vld [vmem:[%s2 + $0x8] sm:$0xff]
        %v214 = vld [vmem:[%s2 + $0x10] sm:$0xff]
        %v218 = vunpack.c.l.b16 %v197
        %v219 = vunpack.c.l.b16 %v198
        %v220 = vunpack.c.l.b16 %v199
        %v221 = vpack.c.b16 %v219, %v218
        %v222 = vpack.c.b16 %v220, %v220
        %v235 = vunpack.c.l.b16 %v200
        %v236 = vunpack.c.l.b16 %v201
        %v237 = vunpack.c.l.b16 %v202
        %v238 = vunpack.c.l.b16 %v203
        %v239 = vunpack.c.l.b16 %v204
        %v240 = vunpack.c.l.b16 %v205
        %v241 = vunpack.c.l.b16 %v206
        %v242 = vunpack.c.l.b16 %v207
        %v243 = vunpack.c.l.b16 %v208
        %v244 = vunpack.c.l.b16 %v209
        %v245 = vunpack.c.l.b16 %v210
        %v246 = vunpack.c.l.b16 %v211
        %v247 = vpack.c.b16 %v236, %v235
        %v248 = vpack.c.b16 %v238, %v237
        %v249 = vpack.c.b16 %v240, %v239
        %v250 = vpack.c.b16 %v242, %v241
        %v251 = vpack.c.b16 %v244, %v243
        %v252 = vpack.c.b16 %v246, %v245
        %vm259 = vcmask 785408
        %v261 = vsel %vm259, %v221, 0
        %v264 = vsel %vm259, %v222, 0
        %266 = vmatprep.subr.bf16.mxu0 0
        %267 = vmatpush1.bf16.msra.mxu0 %v247
        %268 = vmatprep.subr.bf16.mxu0 0
        %269 = vmatpush1.bf16.msra.mxu0 %v248
        %270 = vmatprep.subr.bf16.mxu0 0
        %271 = vmatpush1.bf16.msra.mxu0 %v249
        %272 = vmatprep.subr.bf16.mxu0 0
        %273 = vmatpush1.bf16.msra.mxu0 %v250
        %274 = vmatprep.subr.bf16.mxu0 0
        %275 = vmatpush1.bf16.msra.mxu0 %v251
        %276 = vmatprep.subr.bf16.mxu0 0
        %277 = vmatpush1.bf16.msra.mxu0 %v252
        %278 = vmatprep.subr.bf16.mxu0 0
        %279 = vmatpush1.bf16.msra.mxu0 0
        %280 = vmatprep.subr.bf16.mxu0 0
        %281 = vmatpush1.bf16.msra.mxu0 0
        %282 = vmatprep.subr.bf16.mxu0 0
        %283 = vmatpush1.bf16.msra.mxu0 0
        %284 = vmatprep.subr.bf16.mxu0 0
        %285 = vmatpush1.bf16.msra.mxu0 0
        %286 = vmatprep.subr.bf16.mxu0 0
        %287 = vmatpush1.bf16.msra.mxu0 0
        %288 = vmatprep.subr.bf16.mxu0 0
        %289 = vmatpush1.bf16.msra.mxu0 0
        %290 = vmatprep.subr.bf16.mxu0 0
        %291 = vmatpush1.bf16.msra.mxu0 0
        %292 = vmatprep.subr.bf16.mxu0 0
        %293 = vmatpush1.bf16.msra.mxu0 0
        %294 = vmatprep.subr.bf16.mxu0 0
        %295 = vmatpush1.bf16.msra.mxu0 0
        %296 = vmatprep.subr.bf16.mxu0 0
        %297 = vmatpush1.bf16.msra.mxu0 0
        %298 = vmatprep.mubr.bf16.mxu0 0
        %299 = vmatmul.mubr.bf16.gmra.mrb[0].mxu0 %v261
        %v300 = vpop.f32.mrb[0].mxu0
        %v301 = vadd.f32 %v212, %v300
        %v302 = vpop.f32.mrb[0].mxu0
        %v303 = vpop.f32.mrb[0].mxu0
        %v304 = vadd.f32 %v213, %v303
        %v305 = vpop.f32.mrb[0].mxu0
        %306 = vmatprep.mubr.bf16.mxu0 0
        %307 = vmatmul.mubr.bf16.gmra.mrb[0].mxu0 %v264
        %v308 = vpop.f32.mrb[0].mxu0
        %v309 = vadd.f32 %v214, %v308
        %v310 = vpop.f32.mrb[0].mxu0
        %v311 = vpop.f32.mrb[0].mxu0
        %v312 = vpop.f32.mrb[0].mxu0
        %313 = vdwg.mxu0
        %v314 = vpack.c.bf16 %v301, %v301
        %v315 = vpack.c.bf16 %v304, %v304
        %v316 = vld [vmem:[%s3] sm:$0xff]
        %vm317 = vcmask 64512
        %v319 = vsel %vm317, %v314, 0
        %v322 = vsel %vm317, %v315, 0
        %324 = vmatprep.subr.bf16.mxu0 0
        %325 = vmatpush1.bf16.xpose.msra.mxu0 %v322
        %326 = vmatprep.subr.bf16.mxu0 0
        %327 = vmatpush1.bf16.xpose.msra.mxu0 0
        %328 = vmatprep.subr.bf16.mxu0 0
        %329 = vmatpush1.bf16.xpose.msra.mxu0 0
        %330 = vmatprep.subr.bf16.mxu0 0
        %331 = vmatpush1.bf16.xpose.msra.mxu0 0
        %332 = vmatprep.subr.bf16.mxu0 0
        %333 = vmatpush1.bf16.xpose.msra.mxu0 0
        %334 = vmatprep.subr.bf16.mxu0 0
        %335 = vmatpush1.bf16.xpose.msra.mxu0 0
        %336 = vmatprep.subr.bf16.mxu0 0
        %337 = vmatpush1.bf16.xpose.msra.mxu0 0
        %338 = vmatprep.subr.bf16.mxu0 0
        %339 = vmatpush1.bf16.xpose.msra.mxu0 0
        %340 = vmatprep.subr.bf16.mxu0 0
        %341 = vmatpush1.bf16.xpose.msra.mxu0 0
        %342 = vmatprep.subr.bf16.mxu0 0
        %343 = vmatpush1.bf16.xpose.msra.mxu0 0
        %344 = vmatprep.subr.bf16.mxu0 0
        %345 = vmatpush1.bf16.xpose.msra.mxu0 0
        %346 = vmatprep.subr.bf16.mxu0 0
        %347 = vmatpush1.bf16.xpose.msra.mxu0 0
        %348 = vmatprep.subr.bf16.mxu0 0
        %349 = vmatpush1.bf16.xpose.msra.mxu0 0
        %350 = vmatprep.subr.bf16.mxu0 0
        %351 = vmatpush1.bf16.xpose.msra.mxu0 0
        %352 = vmatprep.subr.bf16.mxu0 0
        %353 = vmatpush1.bf16.xpose.msra.mxu0 0
        %354 = vmatprep.subr.bf16.mxu0 0
        %355 = vmatpush1.bf16.xpose.msra.mxu0 0
        %356 = vmatprep.mubr.bf16.mxu0 0
        %357 = vmatmul.mubr.bf16.gmra.mrb[0].mxu0 %v319
        %v358 = vpop.f32.mrb[0].mxu0
        %v359 = vadd.f32 %v316, %v358
        %v360 = vpop.f32.mrb[0].mxu0
        %v361 = vpop.f32.mrb[0].mxu0
        %v362 = vpop.f32.mrb[0].mxu0
        %363 = vdwg.mxu0
        %v364 = vsel %vm317, %v359, -inf
        %365 = vmax.xlane.f32.xlu0 %v364
        %v366 = vpop.xlane.xlu0 %365
        %v367 = vsub.f32 %v359, %v366
        %v368 = vmul.f32 %v367, 1.442695
        %v369 = vpow.pop %v368
        %v370 = vsel %vm317, %v369, 0.0
        %371 = vadd.xlane.f32.xlu0 %v370
        %v372 = vpop.xlane.xlu0 %371
        %v373 = vrcp.pop %v372
        %v374 = vmul.f32 %v369, %v373
        %v375 = vpack.c.bf16 %v374, %v374
        %v376 = vpack.c.bf16 %v309, %v309
        %v378 = vsel %vm317, %v375, 0
        %vm380 = vcmask 1043456
        %v382 = vsel %vm380, %v376, 0
        %384 = vmatprep.subr.bf16.mxu0 0
        %385 = vmatpush1.bf16.msra.mxu0 %v382
        %386 = vmatprep.subr.bf16.mxu0 0
        %387 = vmatpush1.bf16.msra.mxu0 0
        %388 = vmatprep.subr.bf16.mxu0 0
        %389 = vmatpush1.bf16.msra.mxu0 0
        %390 = vmatprep.subr.bf16.mxu0 0
        %391 = vmatpush1.bf16.msra.mxu0 0
        %392 = vmatprep.subr.bf16.mxu0 0
        %393 = vmatpush1.bf16.msra.mxu0 0
        %394 = vmatprep.subr.bf16.mxu0 0
        %395 = vmatpush1.bf16.msra.mxu0 0
        %396 = vmatprep.subr.bf16.mxu0 0
        %397 = vmatpush1.bf16.msra.mxu0 0
        %398 = vmatprep.subr.bf16.mxu0 0
        %399 = vmatpush1.bf16.msra.mxu0 0
        %400 = vmatprep.subr.bf16.mxu0 0
        %401 = vmatpush1.bf16.msra.mxu0 0
        %402 = vmatprep.subr.bf16.mxu0 0
        %403 = vmatpush1.bf16.msra.mxu0 0
        %404 = vmatprep.subr.bf16.mxu0 0
        %405 = vmatpush1.bf16.msra.mxu0 0
        %406 = vmatprep.subr.bf16.mxu0 0
        %407 = vmatpush1.bf16.msra.mxu0 0
        %408 = vmatprep.subr.bf16.mxu0 0
        %409 = vmatpush1.bf16.msra.mxu0 0
        %410 = vmatprep.subr.bf16.mxu0 0
        %411 = vmatpush1.bf16.msra.mxu0 0
        %412 = vmatprep.subr.bf16.mxu0 0
        %413 = vmatpush1.bf16.msra.mxu0 0
        %414 = vmatprep.subr.bf16.mxu0 0
        %415 = vmatpush1.bf16.msra.mxu0 0
        %416 = vmatprep.mubr.bf16.mxu0 0
        %417 = vmatmul.mubr.bf16.gmra.mrb[0].mxu0 %v378
        %v418 = vpop.f32.mrb[0].mxu0
        %v419 = vadd.f32 0.0, %v418
        %v420 = vpop.f32.mrb[0].mxu0
        %v421 = vpop.f32.mrb[0].mxu0
        %v422 = vpop.f32.mrb[0].mxu0
        %423 = vdwg.mxu0
        %424 = vst.msk [vmem:[%s190] sm:$0xff] %vm317, %v419
        %s425 = sand.u32 %s115, 1
        %s426 = scalar_lea.sflag [#allocation3], %s425
        %s427 = sand.u32 %s115, 1
        %s428 = smul.addr %s427, 8
        %s429 = scalar_lea.vmem [#allocation2], %s428
        // Predicated region
        $region37: #{tpu_custom_call.1} parent=35 // pred_check
          %p430 = pneg %p125
        $region38: #{tpu_custom_call.1} parent=35 // pred_check_branch
          %432 = sbr.rel (%p430) target = $region40
        $region39: #{tpu_custom_call.1} parent=35 // pred_region
          %s434 = ssub.s32 128, 128
          %435 = vsyncadd %s426, %s434
          %s436 = smul.addr %s18, 128
          %s437 = scalar_lea.hbm %s4, %s436
          %s439 = sshll.u32 %s429, 4
          %s440 = int_to_ptr.vmem [resolvable:$true] %s439
          %442 = dma.vmem_to_hbm [thread:$0]  %s440, 128, %s437, %s426
        $region40: #{tpu_custom_call.1} parent=35 // pred_fallthru
          _
      $region36: #{tpu_custom_call.1} parent=5 // pred_fallthru
        _
      %p443 = scmp.le.s32.totalorder 2, %s13
      // Predicated region
      $region41: #{tpu_custom_call.1} parent=5 // pred_check
        %p444 = pneg %p443
      $region42: #{tpu_custom_call.1} parent=5 // pred_check_branch
        %446 = sbr.rel (%p444) target = $region44
      $region43: #{tpu_custom_call.1} parent=5 // pred_region
        %s447 = ssub.s32 %s13, 2
        // Predicated region
        $region45: #{tpu_custom_call.1} parent=43 // pred_check
          %p448 = pneg %p131
        $region46: #{tpu_custom_call.1} parent=43 // pred_check_branch
          %450 = sbr.rel (%p448) target = $region48
        $region47: #{tpu_custom_call.1} parent=43 // pred_region
          %s451 = sand.u32 %s116, 1
          %s452 = scalar_lea.sflag [#allocation3], %s451
          %s453 = sand.u32 %s116, 1
          %s454 = smul.addr %s453, 8
          %s455 = scalar_lea.vmem [#allocation2], %s454
          %456 = dma.done %s452, 128
        $region48: #{tpu_custom_call.1} parent=43 // pred_fallthru
          _
      $region44: #{tpu_custom_call.1} parent=5 // pred_fallthru
        _
    $region6: #{tpu_custom_call.1} parent=1 // loop_footer
      %s17 = sadd.s32 1, %s13
    $region7: #{tpu_custom_call.1} parent=1 // loop_footer_branch
      %12 = sbr.rel target = $region3
    $region8: #{tpu_custom_call.1} parent=1 // loop_exit
      _
    %457 = vsyncpa [#allocation3], 1
    %s458 = scalar_lea.sflag [#allocation3], 1
    %459 = vsyncpa %s458, 1

</llo_original>
